<compile_context>
chip_gen: v6e
topology: v6e:2x2x1
jax: 0.10.0
libtpu: 0.0.40
codegen_flags: <defaults>
</compile_context>

<pallas_src>
import math
from types import SimpleNamespace

import jax
import jax.numpy as jnp
import numpy as np
from jax.experimental import pallas as pl
from jax.experimental.pallas import tpu as pltpu

_LANE = 128
_TN_MAX = 8192   # max lane tile (8 x 8192 f32 block = 256 KiB, fine on v5e/v6e/v7x)


# -----------------------------------------------------------------------------
# Fused kernel.
#   phase 0 (score pass): per-client sums per key -> mean*1e6 -> tanh(Linear)
#                         -> Linear -> softmax(dim=0), stored in att scratch.
#   phase 1 (sum pass)  : out[0, :] = sum_c att[key][c] * x[c, :]  per lane tile.
# -----------------------------------------------------------------------------
def _fused_attention_kernel(tile_key_ref, tile_first_ref, tile_last_ref,
                            key_scale_ref,
                            x_ref, w1_ref, b1_ref, w2_ref, b2_ref,
                            o_ref, acc_ref, att_ref):
    phase = pl.program_id(0)          # 0 = score pass, 1 = weighted-sum pass
    t = pl.program_id(1)              # tile index over the concatenated slab
    k = tile_key_ref[t]               # which parameter key this tile belongs to
    is_score = phase == 0

    # --- phase 0: per-key per-client reduction -------------------------------
    @pl.when(jnp.logical_and(is_score, tile_first_ref[t] == 1))
    def _():
        acc_ref[...] = jnp.zeros_like(acc_ref)

    @pl.when(is_score)
    def _():
        acc_ref[...] += jnp.sum(x_ref[...].astype(jnp.float32), axis=1,
                                keepdims=True)                      # (C, 1)

    @pl.when(jnp.logical_and(is_score, tile_last_ref[t] == 1))
    def _():
        # concat_p[i] = mean(w[i][k] * 1e6)   (scale = 1e6 / numel, zero pad ok)
        p = acc_ref[...] * key_scale_ref[k]                          # (C, 1)
        # nn.Linear in column-vector form:  y = W @ p + b
        z = jnp.tanh(jnp.dot(w1_ref[...], p,
                             preferred_element_type=jnp.float32) + b1_ref[...])
        logits = jnp.dot(w2_ref[...], z,
                         preferred_element_type=jnp.float32) + b2_ref[...]
        logits = logits - jnp.max(logits, axis=0, keepdims=True)
        e = jnp.exp(logits)
        att_ref[k] = e / jnp.sum(e, axis=0, keepdims=True)           # softmax dim=0

    # --- phase 1: attention-weighted sum across clients ----------------------
    @pl.when(phase == 1)
    def _():
        a = att_ref[k]                                               # (C, 1)
        o_ref[...] = jnp.sum(a * x_ref[...].astype(jnp.float32), axis=0,
                             keepdims=True).astype(o_ref.dtype)      # (1, TN)


# -----------------------------------------------------------------------------
# Wrapper: build the concatenated slab + tile tables, call the fused kernel
# once, then slice/reshape the flat output back into a state dict.
# -----------------------------------------------------------------------------
def attention_aggregate(w_list, attn_params, lane_tile=None):
    C = len(w_list)
    w1, b1, w2, b2 = attn_params                 # w1, w2: (C, C);  b1, b2: (C,)
    w1 = w1.astype(jnp.float32)
    w2 = w2.astype(jnp.float32)
    b1c = b1.reshape(C, 1).astype(jnp.float32)
    b2c = b2.reshape(C, 1).astype(jnp.float32)

    names = list(w_list[0].keys())
    num_keys = len(names)

    shapes, dtypes, numels = [], [], []
    for name in names:
        shp = tuple(w_list[0][name].shape)
        shapes.append(shp)
        dtypes.append(w_list[0][name].dtype)
        numels.append(max(1, int(math.prod(shp))))

    # Adaptive lane tile: small dicts get one tile per key, big keys get up to
    # _TN_MAX lanes per grid step (amortizes the ~0.35us per-step overhead).
    if lane_tile is None:
        max_n = max(numels)
        tn = max(_LANE, min(_TN_MAX, ((max_n + _LANE - 1) // _LANE) * _LANE))
    else:
        tn = max(_LANE, ((lane_tile + _LANE - 1) // _LANE) * _LANE)

    tile_key, tile_first, tile_last, key_scale, key_tile_start = [], [], [], [], []
    rows = [[] for _ in range(C)]
    t_total = 0
    for kidx, name in enumerate(names):
        n = numels[kidx]
        t_k = (n + tn - 1) // tn
        npad = t_k * tn
        key_tile_start.append(t_total)
        t_total += t_k
        tile_key += [kidx] * t_k
        tile_first += [1] + [0] * (t_k - 1)
        tile_last += [0] * (t_k - 1) + [1]
        key_scale.append(1e6 / n)
        for i in range(C):
            v = w_list[i][name].reshape(-1)
            rows[i].append(jnp.pad(v, (0, npad - n)))

    # (C, total_lanes) slab in the source dtype; f32 cast happens in-kernel.
    x = jnp.stack([jnp.concatenate(r) for r in rows], axis=0)
    total_lanes = t_total * tn

    tile_key_a = jnp.asarray(np.asarray(tile_key, np.int32))
    tile_first_a = jnp.asarray(np.asarray(tile_first, np.int32))
    tile_last_a = jnp.asarray(np.asarray(tile_last, np.int32))
    key_scale_a = jnp.asarray(np.asarray(key_scale, np.float32))

    def x_map(ph, t, *_):        # same lane tile streamed in both phases
        return (0, t)

    def const_map(ph, t, *_):    # tiny MLP params, resident
        return (0, 0)

    def out_map(ph, t, *_):
        # phase 0: stay parked on block 0 (nothing written, no HBM writeback);
        # phase 1: walk the lane tiles.
        return (0, t * ph)

    out_flat = pl.pallas_call(
        _fused_attention_kernel,
        out_shape=jax.ShapeDtypeStruct((1, total_lanes), x.dtype),
        grid_spec=pltpu.PrefetchScalarGridSpec(
            num_scalar_prefetch=4,
            grid=(2, t_total),
            in_specs=[
                pl.BlockSpec((C, tn), x_map),       # stacked client weights
                pl.BlockSpec((C, C), const_map),    # W1
                pl.BlockSpec((C, 1), const_map),    # b1
                pl.BlockSpec((C, C), const_map),    # W2
                pl.BlockSpec((C, 1), const_map),    # b2
            ],
            out_specs=pl.BlockSpec((1, tn), out_map),
            scratch_shapes=[
                pltpu.VMEM((C, 1), jnp.float32),            # per-key mean acc
                pltpu.VMEM((num_keys, C, 1), jnp.float32),  # per-key softmax
            ],
        ),
        compiler_params=pltpu.CompilerParams(
            dimension_semantics=("arbitrary", "arbitrary")),
    )(tile_key_a, tile_first_a, tile_last_a, key_scale_a,
      x, w1, b1c, w2, b2c)

    w_att = {}
    for kidx, name in enumerate(names):
        off = key_tile_start[kidx] * tn
        n = numels[kidx]
        w_att[name] = (out_flat[0, off:off + n]
                       .reshape(shapes[kidx]).astype(dtypes[kidx]))
    return w_att


# -----------------------------------------------------------------------------
# Pure-JAX reference (mirrors the PyTorch forward exactly)
# -----------------------------------------------------------------------------
def reference_aggregate(w_list, attn_params):
    C = len(w_list)
    w1, b1, w2, b2 = attn_params
    w_att = {}
    for k in w_list[0].keys():
        concat_p = jnp.stack(
            [jnp.mean(w_list[i][k] * 1e6) for i in range(C)]).astype(jnp.float32)
        z = jnp.tanh(concat_p @ w1.T + b1)
        a = jax.nn.softmax(z @ w2.T + b2, axis=0)
        res = 0
        for i in range(C):
            res = res + w_list[i][k] * a[i]
        w_att[k] = res
    return w_att


if __name__ == "__main__":
    # config: attn_dim = int(frac * nusers) = number of clients
    config = SimpleNamespace(frac=0.8, nusers=10)
    C = int(config.frac * config.nusers)          # 8 clients / attn_dim = 8

    key = jax.random.PRNGKey(0)
    k_w1, k_b1, k_w2, k_b2, k_data = jax.random.split(key, 5)

    # Deterministic Linear params (PyTorch-default-style uniform init).
    bound = 1.0 / math.sqrt(C)
    w1 = jax.random.uniform(k_w1, (C, C), jnp.float32, -bound, bound)
    b1 = jax.random.uniform(k_b1, (C,), jnp.float32, -bound, bound)
    w2 = jax.random.uniform(k_w2, (C, C), jnp.float32, -bound, bound)
    b2 = jax.random.uniform(k_b2, (C,), jnp.float32, -bound, bound)
    attn_params = (w1, b1, w2, b2)

    # Synthetic per-client state dicts (small model).
    param_shapes = {
        "conv.weight": (4, 4, 3, 3),
        "fc.weight": (8, 32),
        "fc.bias": (8,),
    }
    data_keys = jax.random.split(k_data, C * len(param_shapes))
    w_list = []
    idx = 0
    for _ in range(C):
        sd = {}
        for name, shp in param_shapes.items():
            sd[name] = jax.random.normal(data_keys[idx], shp, jnp.float32)
            idx += 1
        w_list.append(sd)

    ref = reference_aggregate(w_list, attn_params)

    # 1) default adaptive lane tile (every key fits a single tile)
    out = attention_aggregate(w_list, attn_params)
    out = jax.tree_util.tree_map(jax.block_until_ready, out)
    for name in param_shapes:
        np.testing.assert_allclose(np.asarray(out[name]), np.asarray(ref[name]),
                                   rtol=1e-4, atol=1e-5)

    # 2) forced small lane tile: exercises the multi-tile per-key reduction path
    out2 = attention_aggregate(w_list, attn_params, lane_tile=128)
    out2 = jax.tree_util.tree_map(jax.block_until_ready, out2)
    for name in param_shapes:
        np.testing.assert_allclose(np.asarray(out2[name]), np.asarray(ref[name]),
                                   rtol=1e-4, atol=1e-5)

    print("KERNEL_OK")
</pallas_src>

<mosaic_0001>
module attributes {stable_mosaic.version = 11 : i64} {
  func.func @_fused_attention_kernel(%arg0: i32, %arg1: i32, %arg2: memref<3xi32, #tpu.memory_space<smem>>, %arg3: memref<3xi32, #tpu.memory_space<smem>>, %arg4: memref<3xi32, #tpu.memory_space<smem>>, %arg5: memref<3xf32, #tpu.memory_space<smem>>, %arg6: memref<8x256xf32, #tpu.memory_space<vmem>>, %arg7: memref<8x8xf32, #tpu.memory_space<vmem>>, %arg8: memref<8x1xf32, #tpu.memory_space<vmem>>, %arg9: memref<8x8xf32, #tpu.memory_space<vmem>>, %arg10: memref<8x1xf32, #tpu.memory_space<vmem>>, %arg11: memref<1x256xf32, #tpu.memory_space<vmem>>, %arg12: memref<8x1xf32, #tpu.memory_space<vmem>>, %arg13: memref<3x8x1xf32, #tpu.memory_space<vmem>>) attributes {dimension_semantics = [#tpu.dimension_semantics<arbitrary>, #tpu.dimension_semantics<arbitrary>], iteration_bounds = array<i64: 2, 3>, scalar_prefetch = 4 : i64, scratch_operands = 2 : i64, tpu.core_type = #tpu.core_type<tc>, window_params = [{transform_indices = @transform_0, window_bounds = array<i64: 8, 256>}, {pipeline_mode = #tpu.pipeline_mode<synchronous>, transform_indices = @transform_1, window_bounds = array<i64: 8, 8>}, {pipeline_mode = #tpu.pipeline_mode<synchronous>, transform_indices = @transform_2, window_bounds = array<i64: 8, 1>}, {pipeline_mode = #tpu.pipeline_mode<synchronous>, transform_indices = @transform_3, window_bounds = array<i64: 8, 8>}, {pipeline_mode = #tpu.pipeline_mode<synchronous>, transform_indices = @transform_4, window_bounds = array<i64: 8, 1>}, {transform_indices = @transform_5, window_bounds = array<i64: 1, 256>}]} {
    %0 = arith.index_cast %arg1 : i32 to index
    %1 = memref.load %arg2[%0] : memref<3xi32, #tpu.memory_space<smem>>
    %c0_i32 = arith.constant 0 : i32
    %2 = arith.cmpi eq, %arg0, %c0_i32 : i32
    %3 = arith.index_cast %arg1 : i32 to index
    %4 = memref.load %arg3[%3] : memref<3xi32, #tpu.memory_space<smem>>
    %c1_i32 = arith.constant 1 : i32
    %5 = arith.cmpi eq, %4, %c1_i32 : i32
    %6 = arith.andi %2, %5 : i1
    %7 = arith.extui %6 : i1 to i32
    %c0_i32_0 = arith.constant 0 : i32
    %8 = arith.cmpi ne, %7, %c0_i32_0 : i32
    scf.if %8 {
      %cst = arith.constant 0.000000e+00 : f32
      %20 = vector.broadcast %cst : f32 to vector<8x1xf32>
      %c0 = arith.constant 0 : index
      %c0_6 = arith.constant 0 : index
      %21 = vector.load %arg12[%c0, %c0_6] : memref<8x1xf32, #tpu.memory_space<vmem>>, vector<8x1xf32>
      tpu.vector_store %arg12[%c0, %c0_6], %20 {strides = array<i32>} : memref<8x1xf32, #tpu.memory_space<vmem>>, vector<8x1xf32>,
    } else {
    }
    %9 = arith.extui %2 : i1 to i32
    %c0_i32_1 = arith.constant 0 : i32
    %10 = arith.cmpi ne, %9, %c0_i32_1 : i32
    scf.if %10 {
      %c0 = arith.constant 0 : index
      %c0_6 = arith.constant 0 : index
      %20 = vector.load %arg12[%c0, %c0_6] : memref<8x1xf32, #tpu.memory_space<vmem>>, vector<8x1xf32>
      %c0_7 = arith.constant 0 : index
      %c0_8 = arith.constant 0 : index
      %21 = vector.load %arg6[%c0_7, %c0_8] : memref<8x256xf32, #tpu.memory_space<vmem>>, vector<8x256xf32>
      %cst = arith.constant dense<0.000000e+00> : vector<8xf32>
      %22 = vector.multi_reduction <add>, %21, %cst [1] : vector<8x256xf32> to vector<8xf32>
      %23 = vector.shape_cast %22 : vector<8xf32> to vector<8x1xf32>
      %24 = arith.addf %20, %23 : vector<8x1xf32>
      %c0_9 = arith.constant 0 : index
      %c0_10 = arith.constant 0 : index
      %25 = vector.load %arg12[%c0_9, %c0_10] : memref<8x1xf32, #tpu.memory_space<vmem>>, vector<8x1xf32>
      tpu.vector_store %arg12[%c0_9, %c0_10], %24 {strides = array<i32>} : memref<8x1xf32, #tpu.memory_space<vmem>>, vector<8x1xf32>,
    } else {
    }
    %11 = arith.index_cast %arg1 : i32 to index
    %12 = memref.load %arg4[%11] : memref<3xi32, #tpu.memory_space<smem>>
    %c1_i32_2 = arith.constant 1 : i32
    %13 = arith.cmpi eq, %12, %c1_i32_2 : i32
    %14 = arith.andi %2, %13 : i1
    %15 = arith.extui %14 : i1 to i32
    %c0_i32_3 = arith.constant 0 : i32
    %16 = arith.cmpi ne, %15, %c0_i32_3 : i32
    scf.if %16 {
      %c0 = arith.constant 0 : index
      %c0_6 = arith.constant 0 : index
      %20 = vector.load %arg12[%c0, %c0_6] : memref<8x1xf32, #tpu.memory_space<vmem>>, vector<8x1xf32>
      %21 = arith.index_cast %1 : i32 to index
      %22 = memref.load %arg5[%21] : memref<3xf32, #tpu.memory_space<smem>>
      %23 = vector.broadcast %22 : f32 to vector<8x1xf32>
      %24 = arith.mulf %20, %23 : vector<8x1xf32>
      %c0_7 = arith.constant 0 : index
      %c0_8 = arith.constant 0 : index
      %25 = vector.load %arg7[%c0_7, %c0_8] : memref<8x8xf32, #tpu.memory_space<vmem>>, vector<8x8xf32>
      %cst = arith.constant dense<0.000000e+00> : vector<8x1xf32>
      %26 = tpu.matmul %25, %24, %cst {dimension_numbers = #tpu.dot_dimension_numbers<[1], [0], [0], [1], [0, 0, 1, 1], [], []>} : vector<8x8xf32>, vector<8x1xf32>, vector<8x1xf32> -> vector<8x1xf32>
      %c0_9 = arith.constant 0 : index
      %c0_10 = arith.constant 0 : index
      %27 = vector.load %arg8[%c0_9, %c0_10] : memref<8x1xf32, #tpu.memory_space<vmem>>, vector<8x1xf32>
      %28 = arith.addf %26, %27 : vector<8x1xf32>
      %29 = math.tanh %28 : vector<8x1xf32>
      %c0_11 = arith.constant 0 : index
      %c0_12 = arith.constant 0 : index
      %30 = vector.load %arg9[%c0_11, %c0_12] : memref<8x8xf32, #tpu.memory_space<vmem>>, vector<8x8xf32>
      %cst_13 = arith.constant dense<0.000000e+00> : vector<8x1xf32>
      %31 = tpu.matmul %30, %29, %cst_13 {dimension_numbers = #tpu.dot_dimension_numbers<[1], [0], [0], [1], [0, 0, 1, 1], [], []>} : vector<8x8xf32>, vector<8x1xf32>, vector<8x1xf32> -> vector<8x1xf32>
      %c0_14 = arith.constant 0 : index
      %c0_15 = arith.constant 0 : index
      %32 = vector.load %arg10[%c0_14, %c0_15] : memref<8x1xf32, #tpu.memory_space<vmem>>, vector<8x1xf32>
      %33 = arith.addf %31, %32 : vector<8x1xf32>
      %cst_16 = arith.constant dense<0xFF800000> : vector<1xf32>
      %34 = vector.multi_reduction <maximumf>, %33, %cst_16 [0] : vector<8x1xf32> to vector<1xf32>
      %35 = vector.shape_cast %34 : vector<1xf32> to vector<1x1xf32>
      %36 = vector.broadcast %35 : vector<1x1xf32> to vector<8x1xf32>
      %37 = arith.subf %33, %36 : vector<8x1xf32>
      %38 = math.exp %37 : vector<8x1xf32>
      %cst_17 = arith.constant dense<0.000000e+00> : vector<1xf32>
      %39 = vector.multi_reduction <add>, %38, %cst_17 [0] : vector<8x1xf32> to vector<1xf32>
      %40 = vector.shape_cast %39 : vector<1xf32> to vector<1x1xf32>
      %41 = vector.broadcast %40 : vector<1x1xf32> to vector<8x1xf32>
      %42 = arith.divf %38, %41 : vector<8x1xf32>
      %43 = arith.index_cast %1 : i32 to index
      %c0_18 = arith.constant 0 : index
      %c0_19 = arith.constant 0 : index
      %44 = vector.load %arg13[%43, %c0_18, %c0_19] : memref<3x8x1xf32, #tpu.memory_space<vmem>>, vector<1x8x1xf32>
      %45 = vector.shape_cast %44 : vector<1x8x1xf32> to vector<8x1xf32>
      %46 = vector.shape_cast %42 : vector<8x1xf32> to vector<1x8x1xf32>
      tpu.vector_store %arg13[%43, %c0_18, %c0_19], %46 {strides = array<i32>} : memref<3x8x1xf32, #tpu.memory_space<vmem>>, vector<1x8x1xf32>,
    } else {
    }
    %c1_i32_4 = arith.constant 1 : i32
    %17 = arith.cmpi eq, %arg0, %c1_i32_4 : i32
    %18 = arith.extui %17 : i1 to i32
    %c0_i32_5 = arith.constant 0 : i32
    %19 = arith.cmpi ne, %18, %c0_i32_5 : i32
    scf.if %19 {
      %20 = arith.index_cast %1 : i32 to index
      %c0 = arith.constant 0 : index
      %c0_6 = arith.constant 0 : index
      %21 = vector.load %arg13[%20, %c0, %c0_6] : memref<3x8x1xf32, #tpu.memory_space<vmem>>, vector<1x8x1xf32>
      %22 = vector.shape_cast %21 : vector<1x8x1xf32> to vector<8x1xf32>
      %c0_7 = arith.constant 0 : index
      %c0_8 = arith.constant 0 : index
      %23 = vector.load %arg6[%c0_7, %c0_8] : memref<8x256xf32, #tpu.memory_space<vmem>>, vector<8x256xf32>
      %24 = vector.broadcast %22 : vector<8x1xf32> to vector<8x256xf32>
      %25 = arith.mulf %24, %23 : vector<8x256xf32>
      %cst = arith.constant dense<0.000000e+00> : vector<256xf32>
      %26 = vector.multi_reduction <add>, %25, %cst [0] : vector<8x256xf32> to vector<256xf32>
      %27 = vector.shape_cast %26 : vector<256xf32> to vector<1x256xf32>
      %c0_9 = arith.constant 0 : index
      %c0_10 = arith.constant 0 : index
      %28 = vector.load %arg11[%c0_9, %c0_10] : memref<1x256xf32, #tpu.memory_space<vmem>>, vector<1x256xf32>
      tpu.vector_store %arg11[%c0_9, %c0_10], %27 {strides = array<i32>} : memref<1x256xf32, #tpu.memory_space<vmem>>, vector<1x256xf32>,
    } else {
    }
    return
  }
  func.func @transform_0(%arg0: i32, %arg1: i32, %arg2: memref<3xi32, #tpu.memory_space<smem>>, %arg3: memref<3xi32, #tpu.memory_space<smem>>, %arg4: memref<3xi32, #tpu.memory_space<smem>>, %arg5: memref<3xf32, #tpu.memory_space<smem>>) -> (i32, i32) {
    %c0_i32 = arith.constant 0 : i32
    %c0_i32_0 = arith.constant 0 : i32
    return %c0_i32, %arg1 : i32, i32
  }
  func.func @transform_1(%arg0: i32, %arg1: i32, %arg2: memref<3xi32, #tpu.memory_space<smem>>, %arg3: memref<3xi32, #tpu.memory_space<smem>>, %arg4: memref<3xi32, #tpu.memory_space<smem>>, %arg5: memref<3xf32, #tpu.memory_space<smem>>) -> (i32, i32) {
    %c0_i32 = arith.constant 0 : i32
    %c0_i32_0 = arith.constant 0 : i32
    %c0_i32_1 = arith.constant 0 : i32
    return %c0_i32, %c0_i32_0 : i32, i32
  }
  func.func @transform_2(%arg0: i32, %arg1: i32, %arg2: memref<3xi32, #tpu.memory_space<smem>>, %arg3: memref<3xi32, #tpu.memory_space<smem>>, %arg4: memref<3xi32, #tpu.memory_space<smem>>, %arg5: memref<3xf32, #tpu.memory_space<smem>>) -> (i32, i32) {
    %c0_i32 = arith.constant 0 : i32
    %c0_i32_0 = arith.constant 0 : i32
    %c0_i32_1 = arith.constant 0 : i32
    return %c0_i32, %c0_i32_0 : i32, i32
  }
  func.func @transform_3(%arg0: i32, %arg1: i32, %arg2: memref<3xi32, #tpu.memory_space<smem>>, %arg3: memref<3xi32, #tpu.memory_space<smem>>, %arg4: memref<3xi32, #tpu.memory_space<smem>>, %arg5: memref<3xf32, #tpu.memory_space<smem>>) -> (i32, i32) {
    %c0_i32 = arith.constant 0 : i32
    %c0_i32_0 = arith.constant 0 : i32
    %c0_i32_1 = arith.constant 0 : i32
    return %c0_i32, %c0_i32_0 : i32, i32
  }
  func.func @transform_4(%arg0: i32, %arg1: i32, %arg2: memref<3xi32, #tpu.memory_space<smem>>, %arg3: memref<3xi32, #tpu.memory_space<smem>>, %arg4: memref<3xi32, #tpu.memory_space<smem>>, %arg5: memref<3xf32, #tpu.memory_space<smem>>) -> (i32, i32) {
    %c0_i32 = arith.constant 0 : i32
    %c0_i32_0 = arith.constant 0 : i32
    %c0_i32_1 = arith.constant 0 : i32
    return %c0_i32, %c0_i32_0 : i32, i32
  }
  func.func @transform_5(%arg0: i32, %arg1: i32, %arg2: memref<3xi32, #tpu.memory_space<smem>>, %arg3: memref<3xi32, #tpu.memory_space<smem>>, %arg4: memref<3xi32, #tpu.memory_space<smem>>, %arg5: memref<3xf32, #tpu.memory_space<smem>>) -> (i32, i32) {
    %0 = arith.muli %arg1, %arg0 : i32
    %c0_i32 = arith.constant 0 : i32
    %c0_i32_0 = arith.constant 0 : i32
    return %c0_i32, %0 : i32, i32
  }
}

</mosaic_0001>

<llo_original>
// kernel: tpu_custom_call.1
$region0: #{tpu_custom_call.1}
  #allocation0 [shape = 'u32[]', space=smem, size = 0x4, offset = 0x4, fixed_abs, tag = 'smem constant byte address 0x4 - core index']
  #allocation1 [shape = 'u32[144,128]{1,0:T(1,128)}', space=vmem, size = 0x12000, scoped, tag = 'internal scratch']
  #allocation2 [shape = 'f32[8,1]{1,0:T(8,128)}', space=vmem, size = 0x1000, scoped, tag = 'scratch operand']
  #allocation3 [shape = 'f32[3,8,1]{2,1,0:T(8,128)}', space=vmem, size = 0x3000, scoped, tag = 'scratch operand']
  #allocation4 [shape = 's32[1]{0}', space=sflag, size = 0x4, scoped, tag = 'scoped memory for tpu_custom_call.1']
  #allocation5 [shape = 'u8[512]{0}', space=smem, size = 0x200, scoped, tag = 'prefetched SMEM operand 0']
  #allocation6 [shape = 'u8[512]{0}', space=smem, size = 0x200, scoped, tag = 'prefetched SMEM operand 1']
  #allocation7 [shape = 'u8[512]{0}', space=smem, size = 0x200, scoped, tag = 'prefetched SMEM operand 2']
  #allocation8 [shape = 'u8[512]{0}', space=smem, size = 0x200, scoped, tag = 'prefetched SMEM operand 3']
  %s0 = inlined_call_operand.vmem [shape: s32[3], index: 0, kind: input, shape index: {}]
  %s1 = inlined_call_operand.hbm [shape: s32[3], index: 1, kind: input, shape index: {}]
  %s2 = inlined_call_operand.vmem [shape: s32[3], index: 2, kind: input, shape index: {}]
  %s3 = inlined_call_operand.vmem [shape: f32[3], index: 3, kind: input, shape index: {}]
  %s4 = inlined_call_operand.hbm [shape: f32[8,768], index: 4, kind: input, shape index: {}]
  %s5 = inlined_call_operand.vmem [shape: f32[8,8], index: 5, kind: input, shape index: {}]
  %s6 = inlined_call_operand.vmem [shape: f32[8,1], index: 6, kind: input, shape index: {}]
  %s7 = inlined_call_operand.vmem [shape: f32[8,8], index: 7, kind: input, shape index: {}]
  %s8 = inlined_call_operand.vmem [shape: f32[8,1], index: 8, kind: input, shape index: {}]
  %s9 = inlined_call_operand.hbm [shape: f32[1,768], index: 9, kind: output, shape index: {}]
  %s10 = sld [smem:[#allocation0]]
  $region73: #{tpu_custom_call.1} parent=0
    _
  %s12 = ssub.s32 1, %s10
  %s13 = scalar_select 0, %s12, %s10
  %s14 = sshll.u32 %s0, 4
  %s15 = int_to_ptr.vmem [resolvable:$true] %s14
  %17 = dma.vmem_to_smem %s15, 16, [#allocation5], [#allocation4]
  %19 = dma.hbm_to_smem %s1, 16, [#allocation6], [#allocation4]
  %s20 = sshll.u32 %s2, 4
  %s21 = int_to_ptr.vmem [resolvable:$true] %s20
  %23 = dma.vmem_to_smem %s21, 16, [#allocation7], [#allocation4]
  %s24 = sshll.u32 %s3, 4
  %s25 = int_to_ptr.vmem [resolvable:$true] %s24
  %27 = dma.vmem_to_smem %s25, 16, [#allocation8], [#allocation4]
  %28 = dma.done [#allocation4], 64
  %29 = sfence
  $region1: #{tpu_custom_call.1} parent=0
    #allocation9 [shape = 'u8[16384]{0}', space=vmem, size = 0x4000, scoped, tag = 'input window, operand 4']
    #allocation10 [shape = 's32[2]{0}', space=sflag, size = 0x8, scoped, tag = 'scoped memory for tpu_custom_call.1']
    #allocation11 [shape = 's32[2]{0}', space=sflag, size = 0x8, scoped, tag = 'scoped memory for tpu_custom_call.1']
    #allocation12 [shape = 'u8[2048]{0}', space=vmem, size = 0x800, scoped, tag = 'output window, operand 0']
    %30 = vsyncpa [#allocation10], 0
    %s31 = scalar_lea.sflag [#allocation10], 1
    %32 = vsyncpa %s31, 0
    %33 = vsyncpa [#allocation11], 0
    %s34 = scalar_lea.sflag [#allocation11], 1
    %35 = vsyncpa %s34, 0
    loop: start=0, step=1, limit=8
    $region2: #{tpu_custom_call.1} parent=1 // loop_pre_header
      _
    $region3: #{tpu_custom_call.1} parent=1 // loop_header
      %s37 = sphi 0, %s41
      %p38 = scmp.ge.s32.totalorder %s37, 8
      %s44 = sphi 0, %s56
      %s45 = sphi 0, %s52
      %s46 = sphi 0, %s44
      %s47 = sphi 0, %s45
      %s48 = sphi 0, %s46
      %s49 = sphi 0, %s47
      %s59 = sphi 0, %s61
      %s62 = sphi 0, %s59
      %s63 = sphi 0, %s62
      %s79 = sphi 0, %s63
      %s83 = sphi 0, %s83
      %s85 = sphi 0, %s83
      %s86 = sphi 0, %s85
      %s100 = sphi 0, %s86
      %s104 = sphi 0, %s104
      %s106 = sphi 0, %s104
      %s107 = sphi 0, %s106
      %s121 = sphi 0, %s107
      %s125 = sphi 0, %s125
      %s127 = sphi 0, %s125
      %s128 = sphi 0, %s127
      %s142 = sphi 0, %s128
      %s146 = sphi 0, %s146
      %s148 = sphi 0, %s146
      %s149 = sphi 0, %s148
      %s163 = sphi 0, %s149
      %s171 = sphi 0, %s173
      %s174 = sphi 0, %s171
      %s175 = sphi 0, %s174
      %s191 = sphi 0, %s175
    $region4: #{tpu_custom_call.1} parent=1 // loop_header_branch
      %40 = sbr.rel (%p38) target = $region8
    $region5: #{tpu_custom_call.1} parent=1 // loop_body
      %s42 = ssub.s32 %s37, 1
      %s43 = ssub.s32 %s37, 2
      %s50 = sadd.s32 1, %s45
      %p51 = scmp.ge.s32.totalorder %s50, 3
      %s52 = scalar_select %p51, 0, %s50
      %s53 = sadd.s32 1, %s44
      %s54 = scalar_select %p51, %s53, %s44
      %p55 = scmp.ge.s32.totalorder %s54, 2
      %s56 = scalar_select %p55, 0, %s54
      %s57 = ssub.s32 %s45, %s52
      %p58 = scmp.eq.s32.totalorder %s57, 0
      %s60 = sadd.s32 %s59, 1
      %s61 = scalar_select %p58, %s59, %s60
      %p64 = pneg %p58
      %p65 = scmp.eq.s32.totalorder %s37, 5
      %p66 = por %p64, %p65
      %p67 = scmp.ne.s32.totalorder %s59, %s62
      %p68 = scmp.eq.s32.totalorder %s37, 0
      %p69 = por %p67, %p68
      %p70 = scmp.ne.s32.totalorder %s59, %s62
      %p71 = scmp.eq.s32.totalorder %s42, 5
      %p72 = por %p70, %p71
      %p73 = scmp.ne.s32.totalorder %s62, %s63
      %p74 = scmp.eq.s32.totalorder %s42, 0
      %p75 = por %p73, %p74
      %p76 = scmp.ne.s32.totalorder %s62, %s63
      %p77 = scmp.eq.s32.totalorder %s43, 5
      %p78 = por %p76, %p77
      %p80 = scmp.ne.s32.totalorder %s63, %s79
      %p81 = scmp.eq.s32.totalorder %s43, 0
      %p82 = por %p80, %p81
      %s84 = sadd.s32 %s83, 1
      %p87 = scmp.eq.s32.totalorder %s37, 5
      %p88 = scmp.ne.s32.totalorder %s83, %s85
      %p89 = scmp.eq.s32.totalorder %s37, 0
      %p90 = por %p88, %p89
      %p91 = scmp.ne.s32.totalorder %s83, %s85
      %p92 = scmp.eq.s32.totalorder %s42, 5
      %p93 = por %p91, %p92
      %p94 = scmp.ne.s32.totalorder %s85, %s86
      %p95 = scmp.eq.s32.totalorder %s42, 0
      %p96 = por %p94, %p95
      %p97 = scmp.ne.s32.totalorder %s85, %s86
      %p98 = scmp.eq.s32.totalorder %s43, 5
      %p99 = por %p97, %p98
      %p101 = scmp.ne.s32.totalorder %s86, %s100
      %p102 = scmp.eq.s32.totalorder %s43, 0
      %p103 = por %p101, %p102
      %s105 = sadd.s32 %s104, 1
      %p108 = scmp.eq.s32.totalorder %s37, 5
      %p109 = scmp.ne.s32.totalorder %s104, %s106
      %p110 = scmp.eq.s32.totalorder %s37, 0
      %p111 = por %p109, %p110
      %p112 = scmp.ne.s32.totalorder %s104, %s106
      %p113 = scmp.eq.s32.totalorder %s42, 5
      %p114 = por %p112, %p113
      %p115 = scmp.ne.s32.totalorder %s106, %s107
      %p116 = scmp.eq.s32.totalorder %s42, 0
      %p117 = por %p115, %p116
      %p118 = scmp.ne.s32.totalorder %s106, %s107
      %p119 = scmp.eq.s32.totalorder %s43, 5
      %p120 = por %p118, %p119
      %p122 = scmp.ne.s32.totalorder %s107, %s121
      %p123 = scmp.eq.s32.totalorder %s43, 0
      %p124 = por %p122, %p123
      %s126 = sadd.s32 %s125, 1
      %p129 = scmp.eq.s32.totalorder %s37, 5
      %p130 = scmp.ne.s32.totalorder %s125, %s127
      %p131 = scmp.eq.s32.totalorder %s37, 0
      %p132 = por %p130, %p131
      %p133 = scmp.ne.s32.totalorder %s125, %s127
      %p134 = scmp.eq.s32.totalorder %s42, 5
      %p135 = por %p133, %p134
      %p136 = scmp.ne.s32.totalorder %s127, %s128
      %p137 = scmp.eq.s32.totalorder %s42, 0
      %p138 = por %p136, %p137
      %p139 = scmp.ne.s32.totalorder %s127, %s128
      %p140 = scmp.eq.s32.totalorder %s43, 5
      %p141 = por %p139, %p140
      %p143 = scmp.ne.s32.totalorder %s128, %s142
      %p144 = scmp.eq.s32.totalorder %s43, 0
      %p145 = por %p143, %p144
      %s147 = sadd.s32 %s146, 1
      %p150 = scmp.eq.s32.totalorder %s37, 5
      %p151 = scmp.ne.s32.totalorder %s146, %s148
      %p152 = scmp.eq.s32.totalorder %s37, 0
      %p153 = por %p151, %p152
      %p154 = scmp.ne.s32.totalorder %s146, %s148
      %p155 = scmp.eq.s32.totalorder %s42, 5
      %p156 = por %p154, %p155
      %p157 = scmp.ne.s32.totalorder %s148, %s149
      %p158 = scmp.eq.s32.totalorder %s42, 0
      %p159 = por %p157, %p158
      %p160 = scmp.ne.s32.totalorder %s148, %s149
      %p161 = scmp.eq.s32.totalorder %s43, 5
      %p162 = por %p160, %p161
      %p164 = scmp.ne.s32.totalorder %s149, %s163
      %p165 = scmp.eq.s32.totalorder %s43, 0
      %p166 = por %p164, %p165
      %s167 = smul.u32 %s45, %s44
      %s168 = smul.u32 %s52, %s56
      %s169 = ssub.s32 %s167, %s168
      %p170 = scmp.eq.s32.totalorder %s169, 0
      %s172 = sadd.s32 %s171, 1
      %s173 = scalar_select %p170, %s171, %s172
      %p176 = pneg %p170
      %p177 = scmp.eq.s32.totalorder %s37, 5
      %p178 = por %p176, %p177
      %p179 = scmp.ne.s32.totalorder %s171, %s174
      %p180 = scmp.eq.s32.totalorder %s37, 0
      %p181 = por %p179, %p180
      %p182 = scmp.ne.s32.totalorder %s171, %s174
      %p183 = scmp.eq.s32.totalorder %s42, 5
      %p184 = por %p182, %p183
      %p185 = scmp.ne.s32.totalorder %s174, %s175
      %p186 = scmp.eq.s32.totalorder %s42, 0
      %p187 = por %p185, %p186
      %p188 = scmp.ne.s32.totalorder %s174, %s175
      %p189 = scmp.eq.s32.totalorder %s43, 5
      %p190 = por %p188, %p189
      %p192 = scmp.ne.s32.totalorder %s175, %s191
      %p193 = scmp.eq.s32.totalorder %s43, 0
      %p194 = por %p192, %p193
      %p195 = scmp.le.s32.totalorder 1, %s37
      %p196 = scmp.lt.s32.totalorder %s37, 7
      %p197 = pnand %p195, %p196
      %p198 = pneg %p197
      // Predicated region
      $region9: #{tpu_custom_call.1} parent=5 // pred_check
        _
      $region10: #{tpu_custom_call.1} parent=5 // pred_check_branch
        %200 = sbr.rel (%p197) target = $region12
      $region11: #{tpu_custom_call.1} parent=5 // pred_region
        %s201 = ssub.s32 %s37, 1
        // Predicated region
        $region13: #{tpu_custom_call.1} parent=11 // pred_check
          %p202 = pneg %p96
        $region14: #{tpu_custom_call.1} parent=11 // pred_check_branch
          %204 = sbr.rel (%p202) target = $region16
        $region15: #{tpu_custom_call.1} parent=11 // pred_region
          _
        $region16: #{tpu_custom_call.1} parent=11 // pred_fallthru
          _
        // Predicated region
        $region17: #{tpu_custom_call.1} parent=11 // pred_check
          %p205 = pneg %p117
        $region18: #{tpu_custom_call.1} parent=11 // pred_check_branch
          %207 = sbr.rel (%p205) target = $region20
        $region19: #{tpu_custom_call.1} parent=11 // pred_region
          _
        $region20: #{tpu_custom_call.1} parent=11 // pred_fallthru
          _
        // Predicated region
        $region21: #{tpu_custom_call.1} parent=11 // pred_check
          %p208 = pneg %p138
        $region22: #{tpu_custom_call.1} parent=11 // pred_check_branch
          %210 = sbr.rel (%p208) target = $region24
        $region23: #{tpu_custom_call.1} parent=11 // pred_region
          _
        $region24: #{tpu_custom_call.1} parent=11 // pred_fallthru
          _
        // Predicated region
        $region25: #{tpu_custom_call.1} parent=11 // pred_check
          %p211 = pneg %p159
        $region26: #{tpu_custom_call.1} parent=11 // pred_check_branch
          %213 = sbr.rel (%p211) target = $region28
        $region27: #{tpu_custom_call.1} parent=11 // pred_region
          _
        $region28: #{tpu_custom_call.1} parent=11 // pred_fallthru
          _
      $region12: #{tpu_custom_call.1} parent=5 // pred_fallthru
        _
      %p214 = scmp.lt.s32.totalorder %s37, 6
      // Predicated region
      $region29: #{tpu_custom_call.1} parent=5 // pred_check
        %p215 = pneg %p214
      $region30: #{tpu_custom_call.1} parent=5 // pred_check_branch
        %217 = sbr.rel (%p215) target = $region32
      $region31: #{tpu_custom_call.1} parent=5 // pred_region
        // Predicated region
        $region33: #{tpu_custom_call.1} parent=31 // pred_check
          %p218 = pneg %p69
        $region34: #{tpu_custom_call.1} parent=31 // pred_check_branch
          %220 = sbr.rel (%p218) target = $region36
        $region35: #{tpu_custom_call.1} parent=31 // pred_region
          %s221 = sand.u32 %s59, 1
          %s222 = scalar_lea.sflag [#allocation10], %s221
          %s223 = sand.u32 %s59, 1
          %s224 = smul.addr %s223, 16
          %s225 = scalar_lea.vmem [#allocation9], %s224
          %s226 = smul.u32 2, %s45
          %s228 = ssub.s32 256, 256
          %229 = vsyncadd %s222, %s228
          %s230 = smul.addr %s226, 128
          %s231 = scalar_lea.hbm %s4, %s230
          %s233 = sshll.u32 %s225, 4
          %s234 = int_to_ptr.vmem [resolvable:$true] %s233
          %236 = dma.hbm_to_vmem [thread:$0]  %s231, 256, %s234, %s222
        $region36: #{tpu_custom_call.1} parent=31 // pred_fallthru
          _
      $region32: #{tpu_custom_call.1} parent=5 // pred_fallthru
        _
      %p237 = scmp.le.s32.totalorder 1, %s37
      %p238 = scmp.lt.s32.totalorder %s37, 7
      %p239 = pnand %p237, %p238
      %p240 = pneg %p239
      // Predicated region
      $region37: #{tpu_custom_call.1} parent=5 // pred_check
        _
      $region38: #{tpu_custom_call.1} parent=5 // pred_check_branch
        %242 = sbr.rel (%p239) target = $region40
      $region39: #{tpu_custom_call.1} parent=5 // pred_region
        %s243 = ssub.s32 %s37, 1
        %s244 = sand.u32 %s62, 1
        %s245 = scalar_lea.sflag [#allocation10], %s244
        %s246 = sand.u32 %s62, 1
        %s247 = smul.addr %s246, 16
        %s248 = scalar_lea.vmem [#allocation9], %s247
        // Predicated region
        $region41: #{tpu_custom_call.1} parent=39 // pred_check
          %p249 = pneg %p75
        $region42: #{tpu_custom_call.1} parent=39 // pred_check_branch
          %251 = sbr.rel (%p249) target = $region44
        $region43: #{tpu_custom_call.1} parent=39 // pred_region
          %252 = dma.done %s245, 256
        $region44: #{tpu_custom_call.1} parent=39 // pred_fallthru
          _
        %s253 = sand.u32 %s62, 1
        %s254 = scalar_lea.sflag [#allocation10], %s253
        %s255 = sand.u32 %s62, 1
        %s256 = smul.addr %s255, 16
        %s257 = scalar_lea.vmem [#allocation9], %s256
        %p258 = pneg %p75
        %p259 = pneg %p72
        %p260 = pneg %p96
        %p261 = pneg %p93
        %p262 = pneg %p117
        %p263 = pneg %p114
        %p264 = pneg %p138
        %p265 = pneg %p135
        %p266 = pneg %p159
        %p267 = pneg %p156
        %p268 = pneg %p187
        %p269 = pneg %p184
        %s270 = sand.u32 %s174, 1
        %s271 = scalar_lea.sflag [#allocation11], %s270
        %s272 = sand.u32 %s174, 1
        %s273 = smul.addr %s272, 2
        %s274 = scalar_lea.vmem [#allocation12], %s273
        %s275 = smul.u32 2, %s47
        %s276 = smul.u32 %s47, %s46
        %s277 = smul.u32 2, %s276
        %s278 = sld [smem:[#allocation5 + %s47]]
        %p279 = scmp.eq.s32.totalorder %s46, 0
        %s280 = sld [smem:[#allocation6 + %s47]]
        %p281 = scmp.eq.s32.totalorder %s280, 1
        %p282 = pnand %p279, %p281
        %p283 = pneg %p282
        // Predicated region
        $region45: #{tpu_custom_call.1} parent=39 // pred_check
          _
        $region46: #{tpu_custom_call.1} parent=39 // pred_check_branch
          %285 = sbr.rel (%p282) target = $region48
        $region47: #{tpu_custom_call.1} parent=39 // pred_region
          %vm286 = vcmask 7168
          %287 = vst.msk [vmem:[#allocation2] sm:$0xff] %vm286, 0.0
        $region48: #{tpu_custom_call.1} parent=39 // pred_fallthru
          _
        // Predicated region
        $region49: #{tpu_custom_call.1} parent=39 // pred_check
          %p288 = pneg %p279
        $region50: #{tpu_custom_call.1} parent=39 // pred_check_branch
          %290 = sbr.rel (%p288) target = $region52
        $region51: #{tpu_custom_call.1} parent=39 // pred_region
          %v291 = vld [vmem:[#allocation2] sm:$0xff]
          %v292 = vld [vmem:[%s248] sm:$0xff]
          %v293 = vld [vmem:[%s248 + $0x8] sm:$0xff]
          %v294 = vadd.f32 %v292, %v293
          %295 = vadd.xlane.f32.xlu0 %v294
          %v296 = vpop.xlane.xlu0 %295
          %v297 = vadd.f32 %v291, %v296
          %vm298 = vcmask 7168
          %299 = vst.msk [vmem:[#allocation2] sm:$0xff] %vm298, %v297
        $region52: #{tpu_custom_call.1} parent=39 // pred_fallthru
          _
        %s300 = sld [smem:[#allocation7 + %s47]]
        %p301 = scmp.eq.s32.totalorder %s300, 1
        %p302 = pnand %p279, %p301
        %p303 = pneg %p302
        // Predicated region
        $region53: #{tpu_custom_call.1} parent=39 // pred_check
          _
        $region54: #{tpu_custom_call.1} parent=39 // pred_check_branch
          %305 = sbr.rel (%p302) target = $region56
        $region55: #{tpu_custom_call.1} parent=39 // pred_region
          %v306 = vld [vmem:[#allocation2] sm:$0xff]
          %s307 = sld [smem:[#allocation8 + %s278]]
          %v308 = vstv %s307
          %v309 = vmul.f32 %v306, %v308
          %v310 = vld [vmem:[%s5] sm:$0xff]
          %v311 = vld [vmem:[%s6] sm:$0xff]
          %vm312 = vcmask 64512
          %v314 = vsel %vm312, %v310, 0
          %316 = vmatprep.subr.mxu0 0.0
          %317 = vmatpush1.msra.mxu0 0.0
          %318 = vmatprep.subr.mxu0 0.0
          %319 = vmatpush1.msra.mxu0 0.0
          %320 = vmatprep.subr.mxu0 0.0
          %321 = vmatpush1.msra.mxu0 0.0
          %322 = vmatprep.subr.mxu0 0.0
          %323 = vmatpush1.msra.mxu0 0.0
          %324 = vmatprep.subr.mxu0 0.0
          %325 = vmatpush1.msra.mxu0 0.0
          %326 = vmatprep.subr.mxu0 0.0
          %327 = vmatpush1.msra.mxu0 0.0
          %328 = vmatprep.subr.mxu0 0.0
          %329 = vmatpush1.msra.mxu0 0.0
          %330 = vmatprep.subr.mxu0 0.0
          %331 = vmatpush1.msra.mxu0 0.0
          %332 = vmatprep.subr.mxu0 0.0
          %333 = vmatpush1.msra.mxu0 0.0
          %334 = vmatprep.subr.mxu0 0.0
          %335 = vmatpush1.msra.mxu0 0.0
          %336 = vmatprep.subr.mxu0 0.0
          %337 = vmatpush1.msra.mxu0 0.0
          %338 = vmatprep.subr.mxu0 0.0
          %339 = vmatpush1.msra.mxu0 0.0
          %340 = vmatprep.subr.mxu0 0.0
          %341 = vmatpush1.msra.mxu0 0.0
          %342 = vmatprep.subr.mxu0 0.0
          %343 = vmatpush1.msra.mxu0 0.0
          %344 = vmatprep.subr.mxu0 0.0
          %345 = vmatpush1.msra.mxu0 0.0
          %346 = vmatprep.subr.mxu0 0.0
          %347 = vmatpush1.msra.mxu0 %v309
          %348 = vmatprep.subr.mxu0 0.0
          %349 = vmatpush2.msra.mxu0 0.0
          %350 = vmatprep.subr.mxu0 0.0
          %351 = vmatpush2.msra.mxu0 0.0
          %352 = vmatprep.subr.mxu0 0.0
          %353 = vmatpush2.msra.mxu0 0.0
          %354 = vmatprep.subr.mxu0 0.0
          %355 = vmatpush2.msra.mxu0 0.0
          %356 = vmatprep.subr.mxu0 0.0
          %357 = vmatpush2.msra.mxu0 0.0
          %358 = vmatprep.subr.mxu0 0.0
          %359 = vmatpush2.msra.mxu0 0.0
          %360 = vmatprep.subr.mxu0 0.0
          %361 = vmatpush2.msra.mxu0 0.0
          %362 = vmatprep.subr.mxu0 0.0
          %363 = vmatpush2.msra.mxu0 0.0
          %364 = vmatprep.subr.mxu0 0.0
          %365 = vmatpush2.msra.mxu0 0.0
          %366 = vmatprep.subr.mxu0 0.0
          %367 = vmatpush2.msra.mxu0 0.0
          %368 = vmatprep.subr.mxu0 0.0
          %369 = vmatpush2.msra.mxu0 0.0
          %370 = vmatprep.subr.mxu0 0.0
          %371 = vmatpush2.msra.mxu0 0.0
          %372 = vmatprep.subr.mxu0 0.0
          %373 = vmatpush2.msra.mxu0 0.0
          %374 = vmatprep.subr.mxu0 0.0
          %375 = vmatpush2.msra.mxu0 0.0
          %376 = vmatprep.subr.mxu0 0.0
          %377 = vmatpush2.msra.mxu0 0.0
          %378 = vmatprep.subr.mxu0 0.0
          %379 = vmatpush2.msra.mxu0 0.0
          %380 = vmatprep.mubr.f32.mxu0 0.0
          %381 = vmatmul.mubr.f32.gmra.mxu0 %v314
          %v382 = vpop.f32.mrf.mxu0
          %v383 = vadd.f32 %v311, %v382
          %v384 = vpop.f32.mrf.mxu0
          %385 = vdwg.mxu0
          %v386 = vtanh.pop %v383
          %v387 = vld [vmem:[%s7] sm:$0xff]
          %v388 = vld [vmem:[%s8] sm:$0xff]
          %v390 = vsel %vm312, %v387, 0
          %392 = vmatprep.subr.mxu0 0.0
          %393 = vmatpush1.msra.mxu0 0.0
          %394 = vmatprep.subr.mxu0 0.0
          %395 = vmatpush1.msra.mxu0 0.0
          %396 = vmatprep.subr.mxu0 0.0
          %397 = vmatpush1.msra.mxu0 0.0
          %398 = vmatprep.subr.mxu0 0.0
          %399 = vmatpush1.msra.mxu0 0.0
          %400 = vmatprep.subr.mxu0 0.0
          %401 = vmatpush1.msra.mxu0 0.0
          %402 = vmatprep.subr.mxu0 0.0
          %403 = vmatpush1.msra.mxu0 0.0
          %404 = vmatprep.subr.mxu0 0.0
          %405 = vmatpush1.msra.mxu0 0.0
          %406 = vmatprep.subr.mxu0 0.0
          %407 = vmatpush1.msra.mxu0 0.0
          %408 = vmatprep.subr.mxu0 0.0
          %409 = vmatpush1.msra.mxu0 0.0
          %410 = vmatprep.subr.mxu0 0.0
          %411 = vmatpush1.msra.mxu0 0.0
          %412 = vmatprep.subr.mxu0 0.0
          %413 = vmatpush1.msra.mxu0 0.0
          %414 = vmatprep.subr.mxu0 0.0
          %415 = vmatpush1.msra.mxu0 0.0
          %416 = vmatprep.subr.mxu0 0.0
          %417 = vmatpush1.msra.mxu0 0.0
          %418 = vmatprep.subr.mxu0 0.0
          %419 = vmatpush1.msra.mxu0 0.0
          %420 = vmatprep.subr.mxu0 0.0
          %421 = vmatpush1.msra.mxu0 0.0
          %422 = vmatprep.subr.mxu0 0.0
          %423 = vmatpush1.msra.mxu0 %v386
          %424 = vmatprep.subr.mxu0 0.0
          %425 = vmatpush2.msra.mxu0 0.0
          %426 = vmatprep.subr.mxu0 0.0
          %427 = vmatpush2.msra.mxu0 0.0
          %428 = vmatprep.subr.mxu0 0.0
          %429 = vmatpush2.msra.mxu0 0.0
          %430 = vmatprep.subr.mxu0 0.0
          %431 = vmatpush2.msra.mxu0 0.0
          %432 = vmatprep.subr.mxu0 0.0
          %433 = vmatpush2.msra.mxu0 0.0
          %434 = vmatprep.subr.mxu0 0.0
          %435 = vmatpush2.msra.mxu0 0.0
          %436 = vmatprep.subr.mxu0 0.0
          %437 = vmatpush2.msra.mxu0 0.0
          %438 = vmatprep.subr.mxu0 0.0
          %439 = vmatpush2.msra.mxu0 0.0
          %440 = vmatprep.subr.mxu0 0.0
          %441 = vmatpush2.msra.mxu0 0.0
          %442 = vmatprep.subr.mxu0 0.0
          %443 = vmatpush2.msra.mxu0 0.0
          %444 = vmatprep.subr.mxu0 0.0
          %445 = vmatpush2.msra.mxu0 0.0
          %446 = vmatprep.subr.mxu0 0.0
          %447 = vmatpush2.msra.mxu0 0.0
          %448 = vmatprep.subr.mxu0 0.0
          %449 = vmatpush2.msra.mxu0 0.0
          %450 = vmatprep.subr.mxu0 0.0
          %451 = vmatpush2.msra.mxu0 0.0
          %452 = vmatprep.subr.mxu0 0.0
          %453 = vmatpush2.msra.mxu0 0.0
          %454 = vmatprep.subr.mxu0 0.0
          %455 = vmatpush2.msra.mxu0 0.0
          %456 = vmatprep.mubr.f32.mxu0 0.0
          %457 = vmatmul.mubr.f32.gmra.mxu0 %v390
          %v458 = vpop.f32.mrf.mxu0
          %v459 = vadd.f32 %v388, %v458
          %v460 = vpop.f32.mrf.mxu0
          %461 = vdwg.mxu0
          %vm462 = vcmask 7168
          %v463 = vsel %vm462, %v459, -inf
          %v464 = vrot.slane %v463, 4
          %v465 = vmax.f32 %v463, %v464
          %v466 = vrot.slane %v465, 2
          %v467 = vmax.f32 %v465, %v466
          %v468 = vrot.slane %v467, 1
          %v469 = vmax.f32 %v467, %v468
          %v470 = vsub.f32 %v459, %v469
          %v471 = vmul.f32 %v470, 1.442695
          %v472 = vpow.pop %v471
          %v473 = vsel %vm462, %v472, 0.0
          %v474 = vrot.slane %v473, 4
          %v475 = vadd.f32 %v473, %v474
          %v476 = vrot.slane %v475, 2
          %v477 = vadd.f32 %v475, %v476
          %v478 = vrot.slane %v477, 1
          %v479 = vadd.f32 %v477, %v478
          %v480 = vrcp.pop %v479
          %v481 = vmul.f32 %v472, %v480
          %s482 = smul.u32 %s278, 8
          %s483 = scalar_lea.vmem [#allocation3], %s482
          %484 = vst.msk [vmem:[%s483] sm:$0xff] %vm462, %v481
        $region56: #{tpu_custom_call.1} parent=39 // pred_fallthru
          _
        %p485 = scmp.eq.s32.totalorder %s46, 1
        // Predicated region
        $region57: #{tpu_custom_call.1} parent=39 // pred_check
          %p486 = pneg %p485
        $region58: #{tpu_custom_call.1} parent=39 // pred_check_branch
          %488 = sbr.rel (%p486) target = $region60
        $region59: #{tpu_custom_call.1} parent=39 // pred_region
          %s489 = smul.u32 %s278, 8
          %s490 = scalar_lea.vmem [#allocation3], %s489
          %v491 = vld [vmem:[%s490] sm:$0xff]
          %v492 = vld [vmem:[%s248] sm:$0xff]
          %v493 = vld [vmem:[%s248 + $0x8] sm:$0xff]
          %495 = vset.pattern.permute.xlu0 0
          %496 = vperm.xlu0 %495, %v491
          %v497 = vpop.permute.xlu0 %496
          %v499 = vmul.f32 %v497, %v492
          %v500 = vmul.f32 %v497, %v493
          %v501 = vrot.slane %v499, 4
          %v502 = vadd.f32 %v499, %v501
          %v503 = vrot.slane %v502, 2
          %v504 = vadd.f32 %v502, %v503
          %v505 = vrot.slane %v504, 1
          %v506 = vadd.f32 %v504, %v505
          %v507 = vrot.slane %v500, 4
          %v508 = vadd.f32 %v500, %v507
          %v509 = vrot.slane %v508, 2
          %v510 = vadd.f32 %v508, %v509
          %v511 = vrot.slane %v510, 1
          %v512 = vadd.f32 %v510, %v511
          %v515 = vcombine.low %v506, %v512
          %v517 = vunpack.c.l.s4 1966171168
          %v518 = vunpack.c.0.s8 %v517
          %v519 = vlaneseq
          %v520 = vshrl.u32 %v519, 7
          %v521 = vsub.s32 %v518, %v520
          %v522 = vrot.slane %v515, %v521
          %v524 = vunpack.c.l.s4 1966171168
          %v525 = vunpack.c.0.s8 %v524
          %v526 = vlaneseq
          %v527 = vshrl.u32 %v526, 7
          %v528 = vsub.s32 %v525, %v527
          %v529 = vrot.slane %v522, %v528
          %v531 = vlaneseq
          %vm532 = vcmp.ge.s32.totalorder %v531, 0
          %vm533 = vcmp.lt.s32.totalorder %v531, 256
          %vm534 = vmand %vm532, %vm533
          %535 = vst.msk [vmem:[%s274] sm:$0x3] %vm534, %v529
        $region60: #{tpu_custom_call.1} parent=39 // pred_fallthru
          _
        %s536 = sand.u32 %s174, 1
        %s537 = scalar_lea.sflag [#allocation11], %s536
        %s538 = sand.u32 %s174, 1
        %s539 = smul.addr %s538, 2
        %s540 = scalar_lea.vmem [#allocation12], %s539
        // Predicated region
        $region61: #{tpu_custom_call.1} parent=39 // pred_check
          %p541 = pneg %p184
        $region62: #{tpu_custom_call.1} parent=39 // pred_check_branch
          %543 = sbr.rel (%p541) target = $region64
        $region63: #{tpu_custom_call.1} parent=39 // pred_region
          %s544 = smul.u32 %s47, %s46
          %s545 = smul.u32 2, %s544
          %s547 = ssub.s32 32, 32
          %548 = vsyncadd %s537, %s547
          %s549 = smul.addr %s545, 16
          %s550 = scalar_lea.hbm %s9, %s549
          %s552 = sshll.u32 %s540, 4
          %s553 = int_to_ptr.vmem [resolvable:$true] %s552
          %555 = dma.vmem_to_hbm [thread:$0]  %s553, 32, %s550, %s537
        $region64: #{tpu_custom_call.1} parent=39 // pred_fallthru
          _
      $region40: #{tpu_custom_call.1} parent=5 // pred_fallthru
        _
      %p556 = scmp.le.s32.totalorder 2, %s37
      // Predicated region
      $region65: #{tpu_custom_call.1} parent=5 // pred_check
        %p557 = pneg %p556
      $region66: #{tpu_custom_call.1} parent=5 // pred_check_branch
        %559 = sbr.rel (%p557) target = $region68
      $region67: #{tpu_custom_call.1} parent=5 // pred_region
        %s560 = ssub.s32 %s37, 2
        // Predicated region
        $region69: #{tpu_custom_call.1} parent=67 // pred_check
          %p561 = pneg %p190
        $region70: #{tpu_custom_call.1} parent=67 // pred_check_branch
          %563 = sbr.rel (%p561) target = $region72
        $region71: #{tpu_custom_call.1} parent=67 // pred_region
          %s564 = sand.u32 %s175, 1
          %s565 = scalar_lea.sflag [#allocation11], %s564
          %s566 = sand.u32 %s175, 1
          %s567 = smul.addr %s566, 2
          %s568 = scalar_lea.vmem [#allocation12], %s567
          %569 = dma.done %s565, 32
        $region72: #{tpu_custom_call.1} parent=67 // pred_fallthru
          _
      $region68: #{tpu_custom_call.1} parent=5 // pred_fallthru
        _
    $region6: #{tpu_custom_call.1} parent=1 // loop_footer
      %s41 = sadd.s32 1, %s37
    $region7: #{tpu_custom_call.1} parent=1 // loop_footer_branch
      %36 = sbr.rel target = $region3
    $region8: #{tpu_custom_call.1} parent=1 // loop_exit
      _
    %570 = vsyncpa [#allocation10], 1
    %s571 = scalar_lea.sflag [#allocation10], 1
    %572 = vsyncpa %s571, 1
    %573 = vsyncpa [#allocation11], 1
    %s574 = scalar_lea.sflag [#allocation11], 1
    %575 = vsyncpa %s574, 1

</llo_original>
